<compile_context>
chip_gen: v7x
topology: tpu7x:2x2x1
jax: 0.10.0
libtpu: 0.0.40
codegen_flags: <defaults>
</compile_context>

<pallas_src>
import jax
import jax.numpy as jnp
from jax.experimental import pallas as pl
from jax.experimental.pallas import tpu as pltpu

BN_EPS = 1e-5


def _round_up(x: int, m: int) -> int:
    return (x + m - 1) // m * m


def factorized_reduce_kernel(x_ref, w_ref, p_ref, o_ref):
    k = pl.program_id(1)

    # x is already ReLU'd + bf16 in HBM (done once in the wrapper);
    # MXU matmul with f32 accumulation directly into the resident output block.
    partial = jnp.dot(x_ref[...], w_ref[...], preferred_element_type=jnp.float32)

    @pl.when(k == 0)
    def _():
        o_ref[...] = partial

    @pl.when(k > 0)
    def _():
        o_ref[...] += partial

    @pl.when(k == pl.num_programs(1) - 1)
    def _():
        p = p_ref[...]              # (3, tn) f32: bias / gamma / beta
        bias = p[0:1, :]
        gamma = p[1:2, :]
        beta = p[2:3, :]

        # Linear bias + ReLU.
        # TODO(synk): nn.Dropout in train() would need pltpu.prng_random_bits +
        # masking; treated as identity (eval semantics) here.
        z = jnp.maximum(o_ref[...] + bias, 0.0)

        # BatchNorm1d, training-mode batch statistics, biased variance.
        mean = jnp.mean(z, axis=0, keepdims=True)
        d = z - mean                                   # computed once
        var = jnp.mean(d * d, axis=0, keepdims=True)
        scale = gamma * jax.lax.rsqrt(var + BN_EPS)    # folded affine, (1, tn)

        o_ref[...] = d * scale + beta


def factorized_reduce(x, w, b, gamma, beta, *, tn=None, tk=None):
    """x: (B, in_size) f32; w: (in_size, out_size); b/gamma/beta: (out_size,)."""
    B, in_size = x.shape
    out_size = w.shape[1]

    # Lane-dense padding: last dims become multiples of 128 (no masked vst.msk).
    in_pad = _round_up(in_size, 128)
    out_pad = _round_up(out_size, 128)

    if tn is None:
        # One feature tile when out_pad is moderate -> x streamed from HBM once.
        # (On v7x with small out_pad, tn = out_pad // 2 gives both TCs work.)
        tn = out_pad if out_pad <= 512 else 512
    if tk is None:
        tk = in_pad if in_pad <= 2048 else 512
    tn = min(tn, out_pad)
    tk = min(tk, in_pad)

    # ReLU + bf16 cast fused here (done ONCE), then zero-pad: ReLU(0)*0-weights
    # contribute nothing; padded output features are sliced off and BN stats
    # are per-feature, so padding is exact.
    x_p = jnp.pad(jnp.maximum(x, 0.0).astype(jnp.bfloat16),
                  ((0, 0), (0, in_pad - in_size)))
    w_p = jnp.pad(w, ((0, in_pad - in_size), (0, out_pad - out_size)))
    w_p = w_p.astype(jnp.bfloat16)                 # halve weight DMA bytes

    # Single fused parameter block: row 0 = bias, row 1 = gamma, row 2 = beta.
    params = jnp.stack([
        jnp.pad(b, (0, out_pad - out_size)),
        jnp.pad(gamma, (0, out_pad - out_size)),
        jnp.pad(beta, (0, out_pad - out_size)),
    ]).astype(jnp.float32)                         # (3, out_pad)

    n_j = out_pad // tn
    n_k = in_pad // tk
    grid = (n_j, n_k)                              # (feature tiles, K tiles)

    # Weight stream: triple-buffer when the batch is tiny (per-step cost is
    # then pure weight-DMA time) and there are enough K steps to pipeline.
    w_spec_kwargs = {}
    if B <= 128 and n_k >= 3:
        w_spec_kwargs["pipeline_mode"] = pl.Buffered(3)
    w_buf = 3 if "pipeline_mode" in w_spec_kwargs else 2

    # VMEM budget: x (bf16, 2 bufs) + weights (bf16) + output block (f32, acts
    # as accumulator) + params.  Cap at v7x's 64 MiB physical so the limit is
    # valid on every generation.
    vmem_bytes = (2 * B * tk * 2
                  + w_buf * tk * tn * 2
                  + 2 * B * tn * 4
                  + 2 * 3 * tn * 4)
    vmem_limit = min(max(int(vmem_bytes * 1.5) + (1 << 20), 32 << 20), 64 << 20)
    # TODO(synk): if 2*B*(tk*2 + tn*4) bytes ever exceeds ~64 MiB, add a batch
    # grid axis with sum/sumsq BN partials (zero-padding B would corrupt stats).

    cost = pl.CostEstimate(
        flops=2 * B * in_pad * out_pad,
        bytes_accessed=2 * B * in_pad + 2 * in_pad * out_pad + 4 * B * out_pad,
        transcendentals=0,
    )

    out = pl.pallas_call(
        factorized_reduce_kernel,
        out_shape=jax.ShapeDtypeStruct((B, out_pad), jnp.float32),
        grid_spec=pltpu.PrefetchScalarGridSpec(
            num_scalar_prefetch=0,
            grid=grid,
            in_specs=[
                pl.BlockSpec((B, tk), lambda j, k: (0, k)),    # activations (bf16)
                pl.BlockSpec((tk, tn), lambda j, k: (k, j),    # weights (bf16)
                             **w_spec_kwargs),
                pl.BlockSpec((3, tn), lambda j, k: (0, j)),    # bias/gamma/beta
            ],
            # Output block index constant over k -> resident f32 accumulator.
            out_specs=pl.BlockSpec((B, tn), lambda j, k: (0, j)),
        ),
        compiler_params=pltpu.CompilerParams(
            dimension_semantics=("parallel", "arbitrary"),
            vmem_limit_bytes=vmem_limit,
        ),
        cost_estimate=cost,
    )(x_p, w_p, params)

    return out[:, :out_size]


def reference(x, w, b, gamma, beta):
    # Same math, same bf16-matmul / f32-accumulation numerics as the kernel.
    xr = jnp.maximum(x, 0.0).astype(jnp.bfloat16)
    z = jnp.dot(xr, w.astype(jnp.bfloat16), preferred_element_type=jnp.float32)
    z = jnp.maximum(z + b, 0.0)
    mean = z.mean(axis=0, keepdims=True)
    var = ((z - mean) ** 2).mean(axis=0, keepdims=True)
    return gamma * (z - mean) / jnp.sqrt(var + BN_EPS) + beta


if __name__ == "__main__":
    key = jax.random.PRNGKey(0)
    k_x, k_w, k_b = jax.random.split(key, 3)

    # Small shapes consistent with Linear/BatchNorm1d on (B, F).  At this size
    # the kernel is pure launch overhead; real wins appear at production shapes.
    B, IN, OUT = 8, 32, 32

    x = jax.random.normal(k_x, (B, IN), dtype=jnp.float32)

    # Deterministic parameter init (PyTorch-like uniform fan-in scaling).
    bound = 1.0 / jnp.sqrt(IN)
    w = jax.random.uniform(k_w, (IN, OUT), dtype=jnp.float32, minval=-bound, maxval=bound)
    b = jax.random.uniform(k_b, (OUT,), dtype=jnp.float32, minval=-bound, maxval=bound)
    gamma = jnp.ones((OUT,), dtype=jnp.float32)    # BatchNorm1d affine init
    beta = jnp.zeros((OUT,), dtype=jnp.float32)

    out = factorized_reduce(x, w, b, gamma, beta)
    out = jax.block_until_ready(out)

    ref = reference(x, w, b, gamma, beta)
    assert out.shape == (B, OUT)
    assert jnp.allclose(out, ref, atol=1e-4, rtol=1e-4), "mismatch vs pure-JAX reference"

    print("KERNEL_OK")
</pallas_src>

<mosaic_0001>
module attributes {stable_mosaic.version = 11 : i64} {
  func.func @factorized_reduce_kernel(%arg0: i32, %arg1: i32, %arg2: memref<8x128xbf16, #tpu.memory_space<vmem>>, %arg3: memref<128x128xbf16, #tpu.memory_space<vmem>>, %arg4: memref<3x128xf32, #tpu.memory_space<vmem>>, %arg5: memref<8x128xf32, #tpu.memory_space<vmem>>) attributes {dimension_semantics = [#tpu.dimension_semantics<parallel>, #tpu.dimension_semantics<arbitrary>], iteration_bounds = array<i64: 1, 1>, scalar_prefetch = 0 : i64, scratch_operands = 0 : i64, tpu.core_type = #tpu.core_type<tc>, window_params = [{transform_indices = @transform_0, window_bounds = array<i64: 8, 128>}, {transform_indices = @transform_1, window_bounds = array<i64: 128, 128>}, {transform_indices = @transform_2, window_bounds = array<i64: 3, 128>}, {transform_indices = @transform_3, window_bounds = array<i64: 8, 128>}]} {
    %c0 = arith.constant 0 : index
    %c0_0 = arith.constant 0 : index
    %0 = vector.load %arg2[%c0, %c0_0] : memref<8x128xbf16, #tpu.memory_space<vmem>>, vector<8x128xbf16>
    %c0_1 = arith.constant 0 : index
    %c0_2 = arith.constant 0 : index
    %1 = vector.load %arg3[%c0_1, %c0_2] : memref<128x128xbf16, #tpu.memory_space<vmem>>, vector<128x128xbf16>
    %cst = arith.constant dense<0.000000e+00> : vector<8x128xf32>
    %2 = tpu.matmul %0, %1, %cst {dimension_numbers = #tpu.dot_dimension_numbers<[1], [0], [0], [1], [0, 0, 1, 1], [], []>} : vector<8x128xbf16>, vector<128x128xbf16>, vector<8x128xf32> -> vector<8x128xf32>
    %c0_i32 = arith.constant 0 : i32
    %3 = arith.cmpi eq, %arg1, %c0_i32 : i32
    %4 = arith.extui %3 : i1 to i32
    %c0_i32_3 = arith.constant 0 : i32
    %5 = arith.cmpi ne, %4, %c0_i32_3 : i32
    scf.if %5 {
      %c0_8 = arith.constant 0 : index
      %c0_9 = arith.constant 0 : index
      %12 = vector.load %arg5[%c0_8, %c0_9] : memref<8x128xf32, #tpu.memory_space<vmem>>, vector<8x128xf32>
      tpu.vector_store %arg5[%c0_8, %c0_9], %2 {strides = array<i32>} : memref<8x128xf32, #tpu.memory_space<vmem>>, vector<8x128xf32>,
    } else {
    }
    %c0_i32_4 = arith.constant 0 : i32
    %6 = arith.cmpi sgt, %arg1, %c0_i32_4 : i32
    %7 = arith.extui %6 : i1 to i32
    %c0_i32_5 = arith.constant 0 : i32
    %8 = arith.cmpi ne, %7, %c0_i32_5 : i32
    scf.if %8 {
      %c0_8 = arith.constant 0 : index
      %c0_9 = arith.constant 0 : index
      %12 = vector.load %arg5[%c0_8, %c0_9] : memref<8x128xf32, #tpu.memory_space<vmem>>, vector<8x128xf32>
      %13 = arith.addf %12, %2 : vector<8x128xf32>
      %c0_10 = arith.constant 0 : index
      %c0_11 = arith.constant 0 : index
      %14 = vector.load %arg5[%c0_10, %c0_11] : memref<8x128xf32, #tpu.memory_space<vmem>>, vector<8x128xf32>
      tpu.vector_store %arg5[%c0_10, %c0_11], %13 {strides = array<i32>} : memref<8x128xf32, #tpu.memory_space<vmem>>, vector<8x128xf32>,
    } else {
    }
    %c0_i32_6 = arith.constant 0 : i32
    %9 = arith.cmpi eq, %arg1, %c0_i32_6 : i32
    %10 = arith.extui %9 : i1 to i32
    %c0_i32_7 = arith.constant 0 : i32
    %11 = arith.cmpi ne, %10, %c0_i32_7 : i32
    scf.if %11 {
      %c0_8 = arith.constant 0 : index
      %c0_9 = arith.constant 0 : index
      %12 = vector.load %arg4[%c0_8, %c0_9] : memref<3x128xf32, #tpu.memory_space<vmem>>, vector<3x128xf32>
      %13 = vector.extract_strided_slice %12 {offsets = [0, 0], sizes = [1, 128], strides = [1, 1]} : vector<3x128xf32> to vector<1x128xf32>
      %14 = vector.extract_strided_slice %12 {offsets = [1, 0], sizes = [1, 128], strides = [1, 1]} : vector<3x128xf32> to vector<1x128xf32>
      %15 = vector.extract_strided_slice %12 {offsets = [2, 0], sizes = [1, 128], strides = [1, 1]} : vector<3x128xf32> to vector<1x128xf32>
      %c0_10 = arith.constant 0 : index
      %c0_11 = arith.constant 0 : index
      %16 = vector.load %arg5[%c0_10, %c0_11] : memref<8x128xf32, #tpu.memory_space<vmem>>, vector<8x128xf32>
      %17 = vector.broadcast %13 : vector<1x128xf32> to vector<8x128xf32>
      %18 = arith.addf %16, %17 : vector<8x128xf32>
      %cst_12 = arith.constant 0.000000e+00 : f32
      %19 = vector.broadcast %cst_12 : f32 to vector<8x128xf32>
      %20 = arith.maximumf %18, %19 : vector<8x128xf32>
      %cst_13 = arith.constant dense<0.000000e+00> : vector<128xf32>
      %21 = vector.multi_reduction <add>, %20, %cst_13 [0] : vector<8x128xf32> to vector<128xf32>
      %22 = vector.shape_cast %21 : vector<128xf32> to vector<1x128xf32>
      %cst_14 = arith.constant 8.000000e+00 : f32
      %23 = vector.broadcast %cst_14 : f32 to vector<1x128xf32>
      %24 = arith.divf %22, %23 : vector<1x128xf32>
      %25 = vector.broadcast %24 : vector<1x128xf32> to vector<8x128xf32>
      %26 = arith.subf %20, %25 : vector<8x128xf32>
      %27 = arith.mulf %26, %26 : vector<8x128xf32>
      %cst_15 = arith.constant dense<0.000000e+00> : vector<128xf32>
      %28 = vector.multi_reduction <add>, %27, %cst_15 [0] : vector<8x128xf32> to vector<128xf32>
      %29 = vector.shape_cast %28 : vector<128xf32> to vector<1x128xf32>
      %cst_16 = arith.constant 8.000000e+00 : f32
      %30 = vector.broadcast %cst_16 : f32 to vector<1x128xf32>
      %31 = arith.divf %29, %30 : vector<1x128xf32>
      %cst_17 = arith.constant 9.99999974E-6 : f32
      %32 = vector.broadcast %cst_17 : f32 to vector<1x128xf32>
      %33 = arith.addf %31, %32 : vector<1x128xf32>
      %34 = math.rsqrt %33 : vector<1x128xf32>
      %35 = arith.mulf %14, %34 : vector<1x128xf32>
      %36 = vector.broadcast %35 : vector<1x128xf32> to vector<8x128xf32>
      %37 = arith.mulf %26, %36 : vector<8x128xf32>
      %38 = vector.broadcast %15 : vector<1x128xf32> to vector<8x128xf32>
      %39 = arith.addf %37, %38 : vector<8x128xf32>
      %c0_18 = arith.constant 0 : index
      %c0_19 = arith.constant 0 : index
      %40 = vector.load %arg5[%c0_18, %c0_19] : memref<8x128xf32, #tpu.memory_space<vmem>>, vector<8x128xf32>
      tpu.vector_store %arg5[%c0_18, %c0_19], %39 {strides = array<i32>} : memref<8x128xf32, #tpu.memory_space<vmem>>, vector<8x128xf32>,
    } else {
    }
    return
  }
  func.func @transform_0(%arg0: i32, %arg1: i32) -> (i32, i32) {
    %c0_i32 = arith.constant 0 : i32
    %c0_i32_0 = arith.constant 0 : i32
    return %c0_i32, %arg1 : i32, i32
  }
  func.func @transform_1(%arg0: i32, %arg1: i32) -> (i32, i32) {
    %c0_i32 = arith.constant 0 : i32
    return %arg1, %arg0 : i32, i32
  }
  func.func @transform_2(%arg0: i32, %arg1: i32) -> (i32, i32) {
    %c0_i32 = arith.constant 0 : i32
    %c0_i32_0 = arith.constant 0 : i32
    return %c0_i32, %arg0 : i32, i32
  }
  func.func @transform_3(%arg0: i32, %arg1: i32) -> (i32, i32) {
    %c0_i32 = arith.constant 0 : i32
    %c0_i32_0 = arith.constant 0 : i32
    return %c0_i32, %arg0 : i32, i32
  }
}

</mosaic_0001>

<llo_original>
// kernel: tpu_custom_call.1
$region0: #{tpu_custom_call.1}
  #allocation0 [shape = 'u32[]', space=smem, size = 0x4, offset = 0x4, fixed_abs, tag = 'smem constant byte address 0x4 - core index']
  #allocation1 [shape = 'u32[144,128]{1,0:T(1,128)}', space=vmem, size = 0x12000, scoped, tag = 'internal scratch']
  %s0 = inlined_call_operand.hbm [shape: bf16[8,128], index: 0, kind: input, shape index: {}]
  %s1 = inlined_call_operand.hbm [shape: bf16[128,128], index: 1, kind: input, shape index: {}]
  %s2 = inlined_call_operand.vmem [shape: f32[3,128], index: 2, kind: input, shape index: {}]
  %s3 = inlined_call_operand.hbm [shape: f32[8,128], index: 3, kind: output, shape index: {}]
  %s4 = sld [smem:[#allocation0]]
  $region42: #{tpu_custom_call.1} parent=0
    _
  %s6 = ssub.s32 1, %s4
  %s7 = scalar_select 0, %s6, %s4
  $region1: #{tpu_custom_call.1} parent=0
    #allocation2 [shape = 'u8[2048]{0}', space=vmem, size = 0x800, scoped, tag = 'input window, operand 0, single buffered']
    #allocation3 [shape = 's32[1]{0}', space=sflag, size = 0x4, scoped, tag = 'scoped memory for tpu_custom_call.1']
    #allocation4 [shape = 's32[1]{0}', space=sflag, size = 0x4, scoped, tag = 'scoped memory for tpu_custom_call.1']
    #allocation5 [shape = 'u8[32768]{0}', space=vmem, size = 0x8000, scoped, tag = 'input window, operand 1, single buffered']
    #allocation6 [shape = 's32[1]{0}', space=sflag, size = 0x4, scoped, tag = 'scoped memory for tpu_custom_call.1']
    #allocation7 [shape = 'u8[4096]{0}', space=vmem, size = 0x1000, scoped, tag = 'output window, operand 0, single buffered']
    %8 = vsyncpa [#allocation3], 0
    %9 = vsyncpa [#allocation6], 0
    %10 = vsyncpa [#allocation4], 0
    // Predicated region
    $region2: #{tpu_custom_call.1} parent=1 // pred_check
      _
    $region3: #{tpu_custom_call.1} parent=1 // pred_check_branch
      %12 = sbr.rel (0) target = $region5
    $region4: #{tpu_custom_call.1} parent=1 // pred_region
      %s14 = ssub.s32 64, 64
      %15 = vsyncadd [#allocation3], %s14
      %s17 = sshll.u32 [#allocation2], 4
      %s18 = int_to_ptr.vmem [resolvable:$true] %s17
      %20 = dma.hbm_to_vmem [thread:$0]  %s0, 64, %s18, [#allocation3]
    $region5: #{tpu_custom_call.1} parent=1 // pred_fallthru
      _
    // Predicated region
    $region6: #{tpu_custom_call.1} parent=1 // pred_check
      _
    $region7: #{tpu_custom_call.1} parent=1 // pred_check_branch
      %22 = sbr.rel (0) target = $region9
    $region8: #{tpu_custom_call.1} parent=1 // pred_region
      %s24 = ssub.s32 1024, 1024
      %25 = vsyncadd [#allocation6], %s24
      %s26 = sshll.u32 [#allocation5], 4
      %s27 = int_to_ptr.vmem [resolvable:$true] %s26
      %32 = dma.hbm_to_vmem [thread:$0]  %s1, 1024, %s27, [#allocation6], 64, 64, 4
    $region9: #{tpu_custom_call.1} parent=1 // pred_fallthru
      _
    // Predicated region
    $region10: #{tpu_custom_call.1} parent=1 // pred_check
      _
    $region11: #{tpu_custom_call.1} parent=1 // pred_check_branch
      %34 = sbr.rel (0) target = $region13
    $region12: #{tpu_custom_call.1} parent=1 // pred_region
      _
    $region13: #{tpu_custom_call.1} parent=1 // pred_fallthru
      _
    // Predicated region
    $region14: #{tpu_custom_call.1} parent=1 // pred_check
      _
    $region15: #{tpu_custom_call.1} parent=1 // pred_check_branch
      %36 = sbr.rel (0) target = $region17
    $region16: #{tpu_custom_call.1} parent=1 // pred_region
      %37 = dma.done [#allocation3], 64
    $region17: #{tpu_custom_call.1} parent=1 // pred_fallthru
      _
    // Predicated region
    $region18: #{tpu_custom_call.1} parent=1 // pred_check
      _
    $region19: #{tpu_custom_call.1} parent=1 // pred_check_branch
      %39 = sbr.rel (0) target = $region21
    $region20: #{tpu_custom_call.1} parent=1 // pred_region
      %40 = dma.done [#allocation6], 1024
    $region21: #{tpu_custom_call.1} parent=1 // pred_fallthru
      _
    %v42 = vld [vmem:[#allocation2] sm:$0xf]
    %v43 = vld [vmem:[#allocation5] sm:$0xf]
    %v44 = vld [vmem:[#allocation5 + $0x4] sm:$0xf]
    %v45 = vld [vmem:[#allocation5 + $0x8] sm:$0xf]
    %v46 = vld [vmem:[#allocation5 + $0xc] sm:$0xf]
    %v47 = vld [vmem:[#allocation5 + $0x10] sm:$0xf]
    %v48 = vld [vmem:[#allocation5 + $0x14] sm:$0xf]
    %v49 = vld [vmem:[#allocation5 + $0x18] sm:$0xf]
    %v50 = vld [vmem:[#allocation5 + $0x1c] sm:$0xf]
    %v51 = vld [vmem:[#allocation5 + $0x20] sm:$0xf]
    %v52 = vld [vmem:[#allocation5 + $0x24] sm:$0xf]
    %v53 = vld [vmem:[#allocation5 + $0x28] sm:$0xf]
    %v54 = vld [vmem:[#allocation5 + $0x2c] sm:$0xf]
    %v55 = vld [vmem:[#allocation5 + $0x30] sm:$0xf]
    %v56 = vld [vmem:[#allocation5 + $0x34] sm:$0xf]
    %v57 = vld [vmem:[#allocation5 + $0x38] sm:$0xf]
    %v58 = vld [vmem:[#allocation5 + $0x3c] sm:$0xf]
    %v75 = vunpack.c.l.b16 %v43
    %v76 = vunpack.c.l.b16 %v44
    %v77 = vunpack.c.l.b16 %v45
    %v78 = vunpack.c.l.b16 %v46
    %v79 = vunpack.c.l.b16 %v47
    %v80 = vunpack.c.l.b16 %v48
    %v81 = vunpack.c.l.b16 %v49
    %v82 = vunpack.c.l.b16 %v50
    %v83 = vunpack.c.l.b16 %v51
    %v84 = vunpack.c.l.b16 %v52
    %v85 = vunpack.c.l.b16 %v53
    %v86 = vunpack.c.l.b16 %v54
    %v87 = vunpack.c.l.b16 %v55
    %v88 = vunpack.c.l.b16 %v56
    %v89 = vunpack.c.l.b16 %v57
    %v90 = vunpack.c.l.b16 %v58
    %v91 = vpack.c.b16 %v76, %v75
    %v92 = vpack.c.b16 %v78, %v77
    %v93 = vpack.c.b16 %v80, %v79
    %v94 = vpack.c.b16 %v82, %v81
    %v95 = vpack.c.b16 %v84, %v83
    %v96 = vpack.c.b16 %v86, %v85
    %v97 = vpack.c.b16 %v88, %v87
    %v98 = vpack.c.b16 %v90, %v89
    %107 = vmatprep.subr.bf16.mxu0 0
    %108 = vmatpush1.bf16.msra.mxu0 %v91
    %109 = vmatprep.subr.bf16.mxu0 0
    %110 = vmatpush1.bf16.msra.mxu0 %v92
    %111 = vmatprep.subr.bf16.mxu0 0
    %112 = vmatpush1.bf16.msra.mxu0 %v93
    %113 = vmatprep.subr.bf16.mxu0 0
    %114 = vmatpush1.bf16.msra.mxu0 %v94
    %115 = vmatprep.subr.bf16.mxu0 0
    %116 = vmatpush1.bf16.msra.mxu0 %v95
    %117 = vmatprep.subr.bf16.mxu0 0
    %118 = vmatpush1.bf16.msra.mxu0 %v96
    %119 = vmatprep.subr.bf16.mxu0 0
    %120 = vmatpush1.bf16.msra.mxu0 %v97
    %121 = vmatprep.subr.bf16.mxu0 0
    %122 = vmatpush1.bf16.msra.mxu0 %v98
    %123 = vmatprep.subr.bf16.mxu0 0
    %124 = vmatpush1.bf16.msra.mxu0 0
    %125 = vmatprep.subr.bf16.mxu0 0
    %126 = vmatpush1.bf16.msra.mxu0 0
    %127 = vmatprep.subr.bf16.mxu0 0
    %128 = vmatpush1.bf16.msra.mxu0 0
    %129 = vmatprep.subr.bf16.mxu0 0
    %130 = vmatpush1.bf16.msra.mxu0 0
    %131 = vmatprep.subr.bf16.mxu0 0
    %132 = vmatpush1.bf16.msra.mxu0 0
    %133 = vmatprep.subr.bf16.mxu0 0
    %134 = vmatpush1.bf16.msra.mxu0 0
    %135 = vmatprep.subr.bf16.mxu0 0
    %136 = vmatpush1.bf16.msra.mxu0 0
    %137 = vmatprep.subr.bf16.mxu0 0
    %138 = vmatpush1.bf16.msra.mxu0 0
    %139 = vmatprep.mubr.bf16.mxu0 0
    %140 = vmatmul.mubr.bf16.gmra.mrb[0].mxu0 %v42
    %v141 = vpop.f32.mrb[0].mxu0
    %v142 = vadd.f32 0.0, %v141
    %v143 = vpop.f32.mrb[0].mxu0
    %v144 = vpop.f32.mrb[0].mxu0
    %v145 = vpop.f32.mrb[0].mxu0
    %146 = vdwg.mxu0
    %p147 = scmp.eq.s32.totalorder 0, 0
    // Predicated region
    $region22: #{tpu_custom_call.1} parent=1 // pred_check
      %p148 = pneg %p147
    $region23: #{tpu_custom_call.1} parent=1 // pred_check_branch
      %150 = sbr.rel (%p148) target = $region25
    $region24: #{tpu_custom_call.1} parent=1 // pred_region
      %151 = vst [vmem:[#allocation7] sm:$0xff] %v142
    $region25: #{tpu_custom_call.1} parent=1 // pred_fallthru
      _
    %p152 = scmp.gt.s32.totalorder 0, 0
    // Predicated region
    $region26: #{tpu_custom_call.1} parent=1 // pred_check
      %p153 = pneg %p152
    $region27: #{tpu_custom_call.1} parent=1 // pred_check_branch
      %155 = sbr.rel (%p153) target = $region29
    $region28: #{tpu_custom_call.1} parent=1 // pred_region
      %v156 = vld [vmem:[#allocation7] sm:$0xff]
      %v157 = vadd.f32 %v156, %v142
      %158 = vst [vmem:[#allocation7] sm:$0xff] %v157
    $region29: #{tpu_custom_call.1} parent=1 // pred_fallthru
      _
    // Predicated region
    $region30: #{tpu_custom_call.1} parent=1 // pred_check
      %p159 = pneg %p147
    $region31: #{tpu_custom_call.1} parent=1 // pred_check_branch
      %161 = sbr.rel (%p159) target = $region33
    $region32: #{tpu_custom_call.1} parent=1 // pred_region
      %v162 = vld [vmem:[%s2] sm:$0x7]
      %v163 = vld [vmem:[#allocation7] sm:$0xff]
      %v164 = vlaneseq
      %v165 = vshrl.u32 %v164, 7
      %v166 = vsub.s32 0, %v165
      %v167 = vrot.slane %v162, %v166
      %v168 = vadd.f32 %v163, %v167
      %v169 = vmax.f32 %v168, 0.0
      %v170 = vrot.slane %v169, 4
      %v171 = vadd.f32 %v169, %v170
      %v172 = vrot.slane %v171, 2
      %v173 = vadd.f32 %v171, %v172
      %v174 = vrot.slane %v173, 1
      %v175 = vadd.f32 %v173, %v174
      %v176 = vrcp.pop 8.0
      %v177 = vmul.f32 %v175, %v176
      %v178 = vsub.f32 %v169, %v177
      %v179 = vmul.f32 %v178, %v178
      %v180 = vrot.slane %v179, 4
      %v181 = vadd.f32 %v179, %v180
      %v182 = vrot.slane %v181, 2
      %v183 = vadd.f32 %v181, %v182
      %v184 = vrot.slane %v183, 1
      %v185 = vadd.f32 %v183, %v184
      %v186 = vmul.f32 %v185, %v176
      %v187 = vadd.f32 %v186, 1e-05
      %v188 = vrsqrt.pop %v187
      %v189 = vmul.f32 %v162, %v188
      %v190 = vlaneseq
      %v191 = vshrl.u32 %v190, 7
      %v192 = vsub.s32 1, %v191
      %v193 = vrot.slane %v189, %v192
      %v194 = vmul.f32 %v178, %v193
      %v195 = vlaneseq
      %v196 = vshrl.u32 %v195, 7
      %v197 = vsub.s32 2, %v196
      %v198 = vrot.slane %v162, %v197
      %v199 = vadd.f32 %v194, %v198
      %200 = vst [vmem:[#allocation7] sm:$0xff] %v199
    $region33: #{tpu_custom_call.1} parent=1 // pred_fallthru
      _
    // Predicated region
    $region34: #{tpu_custom_call.1} parent=1 // pred_check
      _
    $region35: #{tpu_custom_call.1} parent=1 // pred_check_branch
      %202 = sbr.rel (0) target = $region37
    $region36: #{tpu_custom_call.1} parent=1 // pred_region
      %s204 = ssub.s32 128, 128
      %205 = vsyncadd [#allocation4], %s204
      %s207 = sshll.u32 [#allocation7], 4
      %s208 = int_to_ptr.vmem [resolvable:$true] %s207
      %210 = dma.vmem_to_hbm [thread:$0]  %s208, 128, %s3, [#allocation4]
    $region37: #{tpu_custom_call.1} parent=1 // pred_fallthru
      _
    // Predicated region
    $region38: #{tpu_custom_call.1} parent=1 // pred_check
      _
    $region39: #{tpu_custom_call.1} parent=1 // pred_check_branch
      %212 = sbr.rel (0) target = $region41
    $region40: #{tpu_custom_call.1} parent=1 // pred_region
      %213 = dma.done [#allocation4], 128
    $region41: #{tpu_custom_call.1} parent=1 // pred_fallthru
      _
    %214 = vsyncpa [#allocation3], 1
    %215 = vsyncpa [#allocation6], 1
    %216 = vsyncpa [#allocation4], 1

</llo_original>
